<compile_context>
chip_gen: v7x
topology: tpu7x:2x2x1
jax: 0.10.0
libtpu: 0.0.40
codegen_flags: <defaults>
</compile_context>

<pallas_src>
import functools

import jax
import jax.numpy as jnp
from jax.experimental import pallas as pl
from jax.experimental.pallas import tpu as pltpu


_LO = 16  # radix of the low LUT-index digit (power of two)


def _bsl_kernel(x_ref, lut2_ref, out_ref, *, res, n_valid, n_pad, nk):
    """One lane-tile of the batch-shaping loss.

    x_ref   : (n_pad, tm) f32 — batch on sublanes, feature tile on lanes
    lut2_ref: (H, 16)     f32 — beta CDF LUT reshaped as (hi, lo) radix-16
    out_ref : (1, 128)    f32 — per-block partial sum (lane-dense store)
    """
    eps = 1.0 / res
    inv_lo = 1.0 / _LO
    x = x_ref[...]
    tm = x.shape[1]
    H = lut2_ref.shape[0]

    # --- clamp + quantize to LUT indices (matches torch: round(x*res) - 1) ---
    xs = jnp.clip(x, eps, 1.0 - eps)
    idx_f = jnp.round(xs * res) - 1.0                      # values in [0, res-2]
    idx = idx_f.astype(jnp.int32)

    # --- LUT gather via radix-16 decomposition --------------------------------
    # p_cdf[i,c] = LUT2[hi[i,c], lo[i,c]].  The lo one-hot is only (n,16,tm)
    # (16x smaller than a full one-hot), so f32 fits comfortably in VMEM and
    # the LUT keeps full precision (no bf16 hi/lo split needed).
    hi_f = jnp.floor(idx_f * inv_lo)                       # exact (idx < 2^24)
    lo = (idx_f - hi_f * _LO).astype(jnp.int32)            # (n_pad, tm), [0,15]
    hi = hi_f.astype(jnp.int32)                            # (n_pad, tm), [0,H-1]

    l_iota = jax.lax.broadcasted_iota(jnp.int32, (1, _LO, 1), 1)
    oh_lo = (lo[:, None, :] == l_iota).astype(jnp.float32)            # (n_pad, 16, tm)
    lut_b = jnp.broadcast_to(lut2_ref[...][None], (n_pad, H, _LO))    # tiny (n,16,16)
    # tmp[i,h,c] = LUT2[h, lo[i,c]]  — one nonzero term per row → exact.
    tmp = jnp.einsum("nhl,nlc->nhc", lut_b, oh_lo,
                     preferred_element_type=jnp.float32)              # (n_pad, H, tm)
    h_iota = jax.lax.broadcasted_iota(jnp.int32, (1, H, 1), 1)
    p_cdf = jnp.sum(jnp.where(hi[:, None, :] == h_iota, tmp, 0.0), axis=1)  # (n_pad, tm)

    # --- rank along the batch axis: single composite-key compare per pair -----
    # key = idx*n_pad + row is a strict total order consistent with sorting by
    # x up to ties inside equal-idx groups; those share p_cdf, so the loss is
    # identical to the sort-based reference.
    row = jax.lax.broadcasted_iota(jnp.int32, (n_pad, tm), 0)
    key = idx * n_pad + row                                # (n_pad, tm) int32
    key_i = key[None, :, :]                                # (1, n_pad, tm): no sublane padding

    if nk == n_pad:
        # single chunk: contrib[k,i,c] = key[k,c] < key[i,c]
        contrib = (key[:, None, :] < key_i).astype(jnp.float32)   # (n_pad, n_pad, tm)
        rank = jnp.sum(contrib, axis=0)                            # (n_pad, tm)
    else:
        def body(c, acc):
            k0 = pl.multiple_of(c * nk, 8)
            xk = jnp.clip(x_ref[pl.ds(k0, nk), :], eps, 1.0 - eps)
            idxk = (jnp.round(xk * res) - 1.0).astype(jnp.int32)
            rowk = c * nk + jax.lax.broadcasted_iota(jnp.int32, (nk, tm), 0)
            keyk = idxk * n_pad + rowk
            contrib = (keyk[:, None, :] < key_i).astype(jnp.float32)  # (nk, n_pad, tm)
            return acc + jnp.sum(contrib, axis=0)

        rank = jax.lax.fori_loop(0, n_pad // nk, body,
                                 jnp.zeros((n_pad, tm), jnp.float32), unroll=2)

    # --- empirical CDF, squared error, masked partial sum ---------------------
    e_cdf = (rank + 1.0) * (1.0 / (n_valid + 1.0))
    d = e_cdf - p_cdf
    sq = d * d
    if n_pad != n_valid:
        sq = jnp.where(row < n_valid, sq, 0.0)             # drop padded rows
    part = jnp.sum(sq, axis=(0, 1), keepdims=True)          # (1, 1)
    out_ref[...] = jnp.broadcast_to(part, out_ref.shape)    # lane-dense (1, 128)


def _pick_tm(m):
    # Prefer >=2 lane blocks: the grid is the only cross-TensorCore parallelism
    # on v7x.  The extra grid step is negligible (~0.35 us) on v5e/v6e.
    if m % 256 == 0 and m // 256 >= 2:
        return 256
    if m % 128 == 0 and m // 128 >= 2:
        return 128
    return m


def _choose_batch_tiling(n, tm):
    """Pick rank-chunk size nk (multiple of 8, <=128) so the per-chunk
    (nk, n_pad, tm) f32 compare tensor stays within a few MiB, then pad n up
    to a multiple of nk."""
    budget = 4 * 1024 * 1024
    n8 = ((n + 7) // 8) * 8
    nk = (budget // (n8 * tm * 4)) // 8 * 8
    nk = max(8, min(128, n8, nk))
    n_pad = ((n + nk - 1) // nk) * nk
    return n_pad, nk


def batch_shaping_loss(x_m, cdf_lut, gamma, beta_cdf_res):
    """Pallas forward of BatchShapingLoss. x_m: (n, m) f32, cdf_lut: (res-1,) f32."""
    n, m = x_m.shape
    tm = _pick_tm(m)
    num_blocks = m // tm
    n_pad, nk = _choose_batch_tiling(n, tm)

    x = x_m.astype(jnp.float32)
    if n_pad != n:
        # Padding rows use a value > 1: after clamping they land in the top
        # LUT bin and (row-index tie-break) rank above every real row, so the
        # real rows' ranks are unchanged; they are masked out of the sum.
        pad = jnp.full((n_pad - n, m), 2.0, jnp.float32)
        x = jnp.concatenate([x, pad], axis=0)

    # LUT padded to H*16 and reshaped (hi, lo); indices never reach the pad.
    R = cdf_lut.shape[0]                        # res - 1
    H = (R + _LO - 1) // _LO
    lut2 = jnp.zeros((H * _LO,), jnp.float32).at[:R].set(
        cdf_lut.astype(jnp.float32)).reshape(H, _LO)

    flops_per_block = (
        2 * n_pad * n_pad * tm                  # composite-key rank (cmp + add)
        + 2 * n_pad * H * _LO * tm              # MXU MACs for the lo-gather
        + 130 * n_pad * tm)                     # one-hots / quantize / select / square
    cost = pl.CostEstimate(
        flops=num_blocks * flops_per_block,
        transcendentals=0,
        bytes_accessed=n_pad * m * 4 + num_blocks * (H * _LO + 128) * 4)

    kernel = functools.partial(_bsl_kernel, res=beta_cdf_res,
                               n_valid=n, n_pad=n_pad, nk=nk)
    out = pl.pallas_call(
        kernel,
        out_shape=jax.ShapeDtypeStruct((1, num_blocks * 128), jnp.float32),
        grid_spec=pltpu.PrefetchScalarGridSpec(
            num_scalar_prefetch=0,
            grid=(num_blocks,),
            in_specs=[
                pl.BlockSpec((n_pad, tm), lambda j: (0, j)),
                pl.BlockSpec((H, _LO), lambda j: (0, 0)),
            ],
            # one independent 128-lane partial-sum block per grid step: no
            # shared accumulator, so the grid axis is truly parallel.
            out_specs=pl.BlockSpec((1, 128), lambda j: (0, j)),
        ),
        compiler_params=pltpu.CompilerParams(
            dimension_semantics=("parallel",),
            vmem_limit_bytes=48 * 1024 * 1024),   # <= v7x physical 64 MiB
        cost_estimate=cost,
    )(x, lut2)

    partials = out.reshape(num_blocks, 128)[:, 0]
    return gamma * jnp.sum(partials) / m


def make_beta_luts(pdf_alpha, pdf_beta, beta_cdf_res):
    """Deterministic LUT construction (replaces scipy.stats.beta in __init__)."""
    xs = jnp.linspace(1.0 / beta_cdf_res, 1.0 - 1.0 / beta_cdf_res,
                      beta_cdf_res - 1).astype(jnp.float32)
    betaln = (jax.scipy.special.gammaln(pdf_alpha) +
              jax.scipy.special.gammaln(pdf_beta) -
              jax.scipy.special.gammaln(pdf_alpha + pdf_beta))
    pdf = jnp.exp((pdf_alpha - 1.0) * jnp.log(xs) +
                  (pdf_beta - 1.0) * jnp.log(1.0 - xs) - betaln)
    cdf = jax.scipy.special.betainc(pdf_alpha, pdf_beta, xs)
    return pdf.astype(jnp.float32), cdf.astype(jnp.float32)


def reference_loss(x_m, cdf_lut, gamma, res):
    """Pure-JAX port of BatchShapingFunc.forward (sort-based), for validation."""
    n = x_m.shape[0]
    x_sort = jnp.sort(x_m, axis=0)
    x_sort = jnp.clip(x_sort, 1.0 / res, 1.0 - 1.0 / res)
    idx = (jnp.round(x_sort * res) - 1).astype(jnp.int32)
    p_cdf = cdf_lut[idx]
    e_cdf = (jnp.arange(1, n + 1, dtype=jnp.float32) / (n + 1))[:, None]
    return gamma * jnp.mean(jnp.sum(jnp.square(e_cdf - p_cdf), axis=0))


if __name__ == "__main__":
    pdf_alpha, pdf_beta = 0.6, 0.4
    beta_cdf_res = 256
    gamma = 0.1
    _, cdf_lut = make_beta_luts(pdf_alpha, pdf_beta, beta_cdf_res)

    key = jax.random.PRNGKey(0)
    # (8, 256):   single rank chunk, 2 lane blocks of 128
    # (16, 512):  single rank chunk, 2 lane blocks of 256
    # (20, 256):  n not a multiple of 8 -> padded sentinel rows + mask
    # (160, 384): chunked fori_loop rank path (unroll=2), 3 lane blocks
    for (n, m) in [(8, 256), (16, 512), (20, 256), (160, 384)]:
        key, sub = jax.random.split(key)
        x_m = jax.random.uniform(sub, (n, m), dtype=jnp.float32,
                                 minval=0.0, maxval=1.0)
        loss = jax.block_until_ready(
            batch_shaping_loss(x_m, cdf_lut, gamma, beta_cdf_res))
        ref = jax.block_until_ready(
            reference_loss(x_m, cdf_lut, gamma, beta_cdf_res))
        assert jnp.allclose(loss, ref, rtol=1e-4, atol=1e-6), (n, m, loss, ref)

    # TODO(synk): backward pass of BatchShapingFunc (custom autograd) not implemented;
    # only the forward-loss semantics are reproduced here.
    print("KERNEL_OK")
</pallas_src>

<mosaic_0001>
module attributes {stable_mosaic.version = 11 : i64} {
  func.func @_bsl_kernel(%arg0: i32, %arg1: memref<8x128xf32, #tpu.memory_space<vmem>>, %arg2: memref<16x16xf32, #tpu.memory_space<vmem>>, %arg3: memref<1x128xf32, #tpu.memory_space<vmem>>) attributes {dimension_semantics = [#tpu.dimension_semantics<parallel>], iteration_bounds = array<i64: 2>, scalar_prefetch = 0 : i64, scratch_operands = 0 : i64, tpu.core_type = #tpu.core_type<tc>, window_params = [{transform_indices = @transform_0, window_bounds = array<i64: 8, 128>}, {pipeline_mode = #tpu.pipeline_mode<synchronous>, transform_indices = @transform_1, window_bounds = array<i64: 16, 16>}, {transform_indices = @transform_2, window_bounds = array<i64: 1, 128>}]} {
    %c0 = arith.constant 0 : index
    %c0_0 = arith.constant 0 : index
    %0 = vector.load %arg1[%c0, %c0_0] : memref<8x128xf32, #tpu.memory_space<vmem>>, vector<8x128xf32>
    %cst = arith.constant 3.906250e-03 : f32
    %cst_1 = arith.constant 0.99609375 : f32
    %1 = vector.broadcast %cst : f32 to vector<8x128xf32>
    %2 = arith.maximumf %1, %0 : vector<8x128xf32>
    %3 = vector.broadcast %cst_1 : f32 to vector<8x128xf32>
    %4 = arith.minimumf %3, %2 : vector<8x128xf32>
    %cst_2 = arith.constant 2.560000e+02 : f32
    %5 = vector.broadcast %cst_2 : f32 to vector<8x128xf32>
    %6 = arith.mulf %4, %5 : vector<8x128xf32>
    %7 = math.roundeven %6 : vector<8x128xf32>
    %cst_3 = arith.constant 1.000000e+00 : f32
    %8 = vector.broadcast %cst_3 : f32 to vector<8x128xf32>
    %9 = arith.subf %7, %8 : vector<8x128xf32>
    %10 = arith.fptosi %9 : vector<8x128xf32> to vector<8x128xi32>
    %cst_4 = arith.constant 6.250000e-02 : f32
    %11 = vector.broadcast %cst_4 : f32 to vector<8x128xf32>
    %12 = arith.mulf %9, %11 : vector<8x128xf32>
    %13 = math.floor %12 : vector<8x128xf32>
    %cst_5 = arith.constant 1.600000e+01 : f32
    %14 = vector.broadcast %cst_5 : f32 to vector<8x128xf32>
    %15 = arith.mulf %13, %14 : vector<8x128xf32>
    %16 = arith.subf %9, %15 : vector<8x128xf32>
    %17 = arith.fptosi %16 : vector<8x128xf32> to vector<8x128xi32>
    %18 = arith.fptosi %13 : vector<8x128xf32> to vector<8x128xi32>
    %19 = tpu.iota {dimensions = array<i32: 1>} : vector<1x16x1xi32>
    %20 = vector.shape_cast %17 : vector<8x128xi32> to vector<8x1x128xi32>
    %21 = vector.broadcast %20 : vector<8x1x128xi32> to vector<8x16x128xi32>
    %22 = vector.broadcast %19 : vector<1x16x1xi32> to vector<8x16x128xi32>
    %23 = arith.cmpi eq, %21, %22 : vector<8x16x128xi32>
    %24 = arith.extui %23 : vector<8x16x128xi1> to vector<8x16x128xi32>
    %25 = arith.sitofp %24 : vector<8x16x128xi32> to vector<8x16x128xf32>
    %c0_6 = arith.constant 0 : index
    %c0_7 = arith.constant 0 : index
    %26 = vector.load %arg2[%c0_6, %c0_7] : memref<16x16xf32, #tpu.memory_space<vmem>>, vector<16x16xf32>
    %27 = vector.shape_cast %26 : vector<16x16xf32> to vector<1x16x16xf32>
    %28 = vector.shape_cast %27 : vector<1x16x16xf32> to vector<1x16x16xf32>
    %29 = vector.broadcast %28 : vector<1x16x16xf32> to vector<8x16x16xf32>
    "tpu.trace_start"() <{level = 10 : i32, message = "nhl,nlc->nhc"}> : () -> ()
    %cst_8 = arith.constant dense<0.000000e+00> : vector<8x16x128xf32>
    %30 = tpu.matmul %29, %25, %cst_8 {dimension_numbers = #tpu.dot_dimension_numbers<[2], [1], [1], [2], [0, 0, 0, 1, 1, 2], [0], [0]>} : vector<8x16x16xf32>, vector<8x16x128xf32>, vector<8x16x128xf32> -> vector<8x16x128xf32>
    "tpu.trace_stop"() : () -> ()
    %31 = tpu.iota {dimensions = array<i32: 1>} : vector<1x16x1xi32>
    %32 = vector.shape_cast %18 : vector<8x128xi32> to vector<8x1x128xi32>
    %33 = vector.broadcast %32 : vector<8x1x128xi32> to vector<8x16x128xi32>
    %34 = vector.broadcast %31 : vector<1x16x1xi32> to vector<8x16x128xi32>
    %35 = arith.cmpi eq, %33, %34 : vector<8x16x128xi32>
    %cst_9 = arith.constant 0.000000e+00 : f32
    %36 = vector.broadcast %cst_9 : f32 to vector<8x16x128xf32>
    %37 = arith.select %35, %30, %36 : vector<8x16x128xi1>, vector<8x16x128xf32>
    %cst_10 = arith.constant dense<0.000000e+00> : vector<8x128xf32>
    %38 = vector.multi_reduction <add>, %37, %cst_10 [1] : vector<8x16x128xf32> to vector<8x128xf32>
    %39 = tpu.iota {dimensions = array<i32: 0>} : vector<8x128xi32>
    %c8_i32 = arith.constant 8 : i32
    %40 = vector.broadcast %c8_i32 : i32 to vector<8x128xi32>
    %41 = arith.muli %10, %40 : vector<8x128xi32>
    %42 = arith.addi %41, %39 : vector<8x128xi32>
    %43 = vector.shape_cast %42 : vector<8x128xi32> to vector<1x8x128xi32>
    %44 = vector.shape_cast %42 : vector<8x128xi32> to vector<8x1x128xi32>
    %45 = vector.broadcast %44 : vector<8x1x128xi32> to vector<8x8x128xi32>
    %46 = vector.broadcast %43 : vector<1x8x128xi32> to vector<8x8x128xi32>
    %47 = arith.cmpi slt, %45, %46 : vector<8x8x128xi32>
    %48 = arith.extui %47 : vector<8x8x128xi1> to vector<8x8x128xi32>
    %49 = arith.sitofp %48 : vector<8x8x128xi32> to vector<8x8x128xf32>
    %cst_11 = arith.constant dense<0.000000e+00> : vector<8x128xf32>
    %50 = vector.multi_reduction <add>, %49, %cst_11 [0] : vector<8x8x128xf32> to vector<8x128xf32>
    %cst_12 = arith.constant 1.000000e+00 : f32
    %51 = vector.broadcast %cst_12 : f32 to vector<8x128xf32>
    %52 = arith.addf %50, %51 : vector<8x128xf32>
    %cst_13 = arith.constant 0.111111112 : f32
    %53 = vector.broadcast %cst_13 : f32 to vector<8x128xf32>
    %54 = arith.mulf %52, %53 : vector<8x128xf32>
    %55 = arith.subf %54, %38 : vector<8x128xf32>
    %56 = arith.mulf %55, %55 : vector<8x128xf32>
    %57 = vector.shape_cast %56 : vector<8x128xf32> to vector<1x8x128xf32>
    %cst_14 = arith.constant dense<0.000000e+00> : vector<1xf32>
    %58 = vector.multi_reduction <add>, %57, %cst_14 [1, 2] : vector<1x8x128xf32> to vector<1xf32>
    %59 = vector.shape_cast %58 : vector<1xf32> to vector<1x1x1xf32>
    %60 = vector.extract %59[0, 0, 0] : f32 from vector<1x1x1xf32>
    %61 = vector.broadcast %60 : f32 to vector<1x1xf32>
    %62 = vector.shape_cast %61 : vector<1x1xf32> to vector<1x1xf32>
    %63 = vector.broadcast %62 : vector<1x1xf32> to vector<1x128xf32>
    %c0_15 = arith.constant 0 : index
    %c0_16 = arith.constant 0 : index
    %64 = vector.load %arg3[%c0_15, %c0_16] : memref<1x128xf32, #tpu.memory_space<vmem>>, vector<1x128xf32>
    tpu.vector_store %arg3[%c0_15, %c0_16], %63 {strides = array<i32>} : memref<1x128xf32, #tpu.memory_space<vmem>>, vector<1x128xf32>,
    return
  }
  func.func @transform_0(%arg0: i32) -> (i32, i32) {
    %c0_i32 = arith.constant 0 : i32
    %c0_i32_0 = arith.constant 0 : i32
    return %c0_i32, %arg0 : i32, i32
  }
  func.func @transform_1(%arg0: i32) -> (i32, i32) {
    %c0_i32 = arith.constant 0 : i32
    %c0_i32_0 = arith.constant 0 : i32
    %c0_i32_1 = arith.constant 0 : i32
    return %c0_i32, %c0_i32_0 : i32, i32
  }
  func.func @transform_2(%arg0: i32) -> (i32, i32) {
    %c0_i32 = arith.constant 0 : i32
    %c0_i32_0 = arith.constant 0 : i32
    return %c0_i32, %arg0 : i32, i32
  }
}

</mosaic_0001>

<llo_original>
// kernel: tpu_custom_call.1
$region0: #{tpu_custom_call.1}
  #allocation0 [shape = 'u32[]', space=smem, size = 0x4, offset = 0x4, fixed_abs, tag = 'smem constant byte address 0x4 - core index']
  #allocation1 [shape = 'u32[144,128]{1,0:T(1,128)}', space=vmem, size = 0x12000, scoped, tag = 'internal scratch']
  %s0 = inlined_call_operand.hbm [shape: f32[8,256], index: 0, kind: input, shape index: {}]
  %s1 = inlined_call_operand.hbm [shape: f32[16,16], index: 1, kind: input, shape index: {}]
  %s2 = inlined_call_operand.hbm [shape: f32[1,256], index: 2, kind: output, shape index: {}]
  %s3 = sld [smem:[#allocation0]]
  $region49: #{tpu_custom_call.1} parent=0
    _
  %s5 = ssub.s32 1, %s3
  %s6 = scalar_select 0, %s5, %s3
  $region1: #{tpu_custom_call.1} parent=0
    #allocation2 [shape = 'u8[8192]{0}', space=vmem, size = 0x2000, scoped, tag = 'input window, operand 0']
    #allocation3 [shape = 's32[2]{0}', space=sflag, size = 0x8, scoped, tag = 'scoped memory for tpu_custom_call.1']
    #allocation4 [shape = 's32[2]{0}', space=sflag, size = 0x8, scoped, tag = 'scoped memory for tpu_custom_call.1']
    #allocation5 [shape = 'u8[8192]{0}', space=vmem, size = 0x2000, scoped, tag = 'input window, operand 1, single buffered']
    #allocation6 [shape = 's32[1]{0}', space=sflag, size = 0x4, scoped, tag = 'scoped memory for tpu_custom_call.1']
    #allocation7 [shape = 'u8[1024]{0}', space=vmem, size = 0x400, scoped, tag = 'output window, operand 0']
    %7 = vsyncpa [#allocation3], 0
    %s8 = scalar_lea.sflag [#allocation3], 1
    %9 = vsyncpa %s8, 0
    %10 = vsyncpa [#allocation6], 0
    %11 = vsyncpa [#allocation4], 0
    %s12 = scalar_lea.sflag [#allocation4], 1
    %13 = vsyncpa %s12, 0
    loop: start=0, step=1, limit=4
    $region2: #{tpu_custom_call.1} parent=1 // loop_pre_header
      _
    $region3: #{tpu_custom_call.1} parent=1 // loop_header
      %s15 = sphi 0, %s19
      %p16 = scmp.ge.s32.totalorder %s15, 4
      %s25 = sphi 0, %s27
      %s28 = sphi 0, %s25
      %s29 = sphi 0, %s28
      %s45 = sphi 0, %s29
      %s49 = sphi 0, %s49
      %s51 = sphi 0, %s49
      %s52 = sphi 0, %s51
      %s66 = sphi 0, %s52
      %s72 = sphi 0, %s74
      %s75 = sphi 0, %s72
      %s76 = sphi 0, %s75
      %s92 = sphi 0, %s76
    $region4: #{tpu_custom_call.1} parent=1 // loop_header_branch
      %18 = sbr.rel (%p16) target = $region8
    $region5: #{tpu_custom_call.1} parent=1 // loop_body
      %s20 = ssub.s32 %s15, 1
      %s21 = ssub.s32 %s15, 2
      %s22 = sadd.s32 %s15, 1
      %s23 = ssub.s32 %s15, %s22
      %p24 = scmp.eq.s32.totalorder %s23, 0
      %s26 = sadd.s32 %s25, 1
      %s27 = scalar_select %p24, %s25, %s26
      %p30 = pneg %p24
      %p31 = scmp.eq.s32.totalorder %s15, 1
      %p32 = por %p30, %p31
      %p33 = scmp.ne.s32.totalorder %s25, %s28
      %p34 = scmp.eq.s32.totalorder %s15, 0
      %p35 = por %p33, %p34
      %p36 = scmp.ne.s32.totalorder %s25, %s28
      %p37 = scmp.eq.s32.totalorder %s20, 1
      %p38 = por %p36, %p37
      %p39 = scmp.ne.s32.totalorder %s28, %s29
      %p40 = scmp.eq.s32.totalorder %s20, 0
      %p41 = por %p39, %p40
      %p42 = scmp.ne.s32.totalorder %s28, %s29
      %p43 = scmp.eq.s32.totalorder %s21, 1
      %p44 = por %p42, %p43
      %p46 = scmp.ne.s32.totalorder %s29, %s45
      %p47 = scmp.eq.s32.totalorder %s21, 0
      %p48 = por %p46, %p47
      %s50 = sadd.s32 %s49, 1
      %p53 = scmp.eq.s32.totalorder %s15, 1
      %p54 = scmp.ne.s32.totalorder %s49, %s51
      %p55 = scmp.eq.s32.totalorder %s15, 0
      %p56 = por %p54, %p55
      %p57 = scmp.ne.s32.totalorder %s49, %s51
      %p58 = scmp.eq.s32.totalorder %s20, 1
      %p59 = por %p57, %p58
      %p60 = scmp.ne.s32.totalorder %s51, %s52
      %p61 = scmp.eq.s32.totalorder %s20, 0
      %p62 = por %p60, %p61
      %p63 = scmp.ne.s32.totalorder %s51, %s52
      %p64 = scmp.eq.s32.totalorder %s21, 1
      %p65 = por %p63, %p64
      %p67 = scmp.ne.s32.totalorder %s52, %s66
      %p68 = scmp.eq.s32.totalorder %s21, 0
      %p69 = por %p67, %p68
      %s70 = ssub.s32 %s15, %s22
      %p71 = scmp.eq.s32.totalorder %s70, 0
      %s73 = sadd.s32 %s72, 1
      %s74 = scalar_select %p71, %s72, %s73
      %p77 = pneg %p71
      %p78 = scmp.eq.s32.totalorder %s15, 1
      %p79 = por %p77, %p78
      %p80 = scmp.ne.s32.totalorder %s72, %s75
      %p81 = scmp.eq.s32.totalorder %s15, 0
      %p82 = por %p80, %p81
      %p83 = scmp.ne.s32.totalorder %s72, %s75
      %p84 = scmp.eq.s32.totalorder %s20, 1
      %p85 = por %p83, %p84
      %p86 = scmp.ne.s32.totalorder %s75, %s76
      %p87 = scmp.eq.s32.totalorder %s20, 0
      %p88 = por %p86, %p87
      %p89 = scmp.ne.s32.totalorder %s75, %s76
      %p90 = scmp.eq.s32.totalorder %s21, 1
      %p91 = por %p89, %p90
      %p93 = scmp.ne.s32.totalorder %s76, %s92
      %p94 = scmp.eq.s32.totalorder %s21, 0
      %p95 = por %p93, %p94
      %p96 = scmp.le.s32.totalorder 1, %s15
      %p97 = scmp.lt.s32.totalorder %s15, 3
      %p98 = pnand %p96, %p97
      %p99 = pneg %p98
      // Predicated region
      $region9: #{tpu_custom_call.1} parent=5 // pred_check
        _
      $region10: #{tpu_custom_call.1} parent=5 // pred_check_branch
        %101 = sbr.rel (%p98) target = $region12
      $region11: #{tpu_custom_call.1} parent=5 // pred_region
        %s102 = ssub.s32 %s15, 1
        // Predicated region
        $region13: #{tpu_custom_call.1} parent=11 // pred_check
          %p103 = pneg %p62
        $region14: #{tpu_custom_call.1} parent=11 // pred_check_branch
          %105 = sbr.rel (%p103) target = $region16
        $region15: #{tpu_custom_call.1} parent=11 // pred_region
          %s107 = ssub.s32 256, 256
          %108 = vsyncadd [#allocation6], %s107
          %s109 = sshll.u32 [#allocation5], 4
          %s110 = int_to_ptr.vmem [resolvable:$true] %s109
          %115 = dma.hbm_to_vmem [thread:$0]  %s1, 256, %s110, [#allocation6], 128, 128, 8
        $region16: #{tpu_custom_call.1} parent=11 // pred_fallthru
          _
      $region12: #{tpu_custom_call.1} parent=5 // pred_fallthru
        _
      %p116 = scmp.lt.s32.totalorder %s15, 2
      // Predicated region
      $region17: #{tpu_custom_call.1} parent=5 // pred_check
        %p117 = pneg %p116
      $region18: #{tpu_custom_call.1} parent=5 // pred_check_branch
        %119 = sbr.rel (%p117) target = $region20
      $region19: #{tpu_custom_call.1} parent=5 // pred_region
        // Predicated region
        $region21: #{tpu_custom_call.1} parent=19 // pred_check
          %p120 = pneg %p35
        $region22: #{tpu_custom_call.1} parent=19 // pred_check_branch
          %122 = sbr.rel (%p120) target = $region24
        $region23: #{tpu_custom_call.1} parent=19 // pred_region
          %s123 = sand.u32 %s25, 1
          %s124 = scalar_lea.sflag [#allocation3], %s123
          %s125 = sand.u32 %s25, 1
          %s126 = smul.addr %s125, 8
          %s127 = scalar_lea.vmem [#allocation2], %s126
          %s129 = ssub.s32 128, 128
          %130 = vsyncadd %s124, %s129
          %s131 = smul.addr %s15, 128
          %s132 = scalar_lea.hbm %s0, %s131
          %s134 = sshll.u32 %s127, 4
          %s135 = int_to_ptr.vmem [resolvable:$true] %s134
          %137 = dma.hbm_to_vmem [thread:$0]  %s132, 128, %s135, %s124
        $region24: #{tpu_custom_call.1} parent=19 // pred_fallthru
          _
      $region20: #{tpu_custom_call.1} parent=5 // pred_fallthru
        _
      %p138 = scmp.le.s32.totalorder 1, %s15
      %p139 = scmp.lt.s32.totalorder %s15, 3
      %p140 = pnand %p138, %p139
      %p141 = pneg %p140
      // Predicated region
      $region25: #{tpu_custom_call.1} parent=5 // pred_check
        _
      $region26: #{tpu_custom_call.1} parent=5 // pred_check_branch
        %143 = sbr.rel (%p140) target = $region28
      $region27: #{tpu_custom_call.1} parent=5 // pred_region
        %s144 = ssub.s32 %s15, 1
        %s145 = sand.u32 %s28, 1
        %s146 = scalar_lea.sflag [#allocation3], %s145
        %s147 = sand.u32 %s28, 1
        %s148 = smul.addr %s147, 8
        %s149 = scalar_lea.vmem [#allocation2], %s148
        // Predicated region
        $region29: #{tpu_custom_call.1} parent=27 // pred_check
          %p150 = pneg %p41
        $region30: #{tpu_custom_call.1} parent=27 // pred_check_branch
          %152 = sbr.rel (%p150) target = $region32
        $region31: #{tpu_custom_call.1} parent=27 // pred_region
          %153 = dma.done %s146, 128
        $region32: #{tpu_custom_call.1} parent=27 // pred_fallthru
          _
        // Predicated region
        $region33: #{tpu_custom_call.1} parent=27 // pred_check
          %p154 = pneg %p62
        $region34: #{tpu_custom_call.1} parent=27 // pred_check_branch
          %156 = sbr.rel (%p154) target = $region36
        $region35: #{tpu_custom_call.1} parent=27 // pred_region
          %157 = dma.done [#allocation6], 256
        $region36: #{tpu_custom_call.1} parent=27 // pred_fallthru
          _
        %s158 = sand.u32 %s28, 1
        %s159 = scalar_lea.sflag [#allocation3], %s158
        %s160 = sand.u32 %s28, 1
        %s161 = smul.addr %s160, 8
        %s162 = scalar_lea.vmem [#allocation2], %s161
        %p163 = pneg %p41
        %p164 = pneg %p38
        %p165 = pneg %p62
        %p166 = pneg %p59
        %p167 = pneg %p88
        %p168 = pneg %p85
        %s169 = sand.u32 %s75, 1
        %s170 = scalar_lea.sflag [#allocation4], %s169
        %s171 = sand.u32 %s75, 1
        %s172 = scalar_lea.vmem [#allocation7], %s171
        %v173 = vld [vmem:[%s149] sm:$0xff]
        %v174 = vmax.f32 %v173, 0.00390625
        %v175 = vmin.f32 %v174, 0.99609375
        %v176 = vmul.f32 %v175, 256.0
        %v177 = vround.ne.pseudo %v176
        %v178 = vsub.f32 %v177, 1.0
        %v179 = vcvt.f32.s32.to.zero.pseudo %v178
        %v180 = vmul.f32 %v178, 0.0625
        %v181 = vfloor.f32 %v180
        %v182 = vmul.f32 %v181, 16.0
        %v183 = vsub.f32 %v178, %v182
        %v184 = vcvt.f32.s32.to.zero.pseudo %v183
        %v185 = vcvt.f32.s32.to.zero.pseudo %v181
        %v186 = vlaneseq
        %v187 = vshrl.u32 %v186, 7
        %v188 = vadd.s32 %v187, 8
        %v189 = vcombine.high %v184, %v184
        %v191 = vunpack.c.l.s4 1966171168
        %v192 = vunpack.c.0.s8 %v191
        %v193 = vlaneseq
        %v194 = vshrl.u32 %v193, 7
        %v195 = vsub.s32 %v192, %v194
        %v196 = vrot.slane %v184, %v195
        %v198 = vunpack.c.l.s4 1966171168
        %v199 = vunpack.c.0.s8 %v198
        %v200 = vlaneseq
        %v201 = vshrl.u32 %v200, 7
        %v202 = vsub.s32 %v199, %v201
        %v203 = vrot.slane %v189, %v202
        %v204 = vcombine.high %v196, %v196
        %v205 = vcombine.high %v203, %v203
        %v207 = vunpack.c.l.s4 1966171168
        %v208 = vunpack.c.0.s8 %v207
        %v209 = vlaneseq
        %v210 = vshrl.u32 %v209, 7
        %v211 = vsub.s32 %v208, %v210
        %v212 = vrot.slane %v196, %v211
        %v214 = vunpack.c.l.s4 1966171168
        %v215 = vunpack.c.0.s8 %v214
        %v216 = vlaneseq
        %v217 = vshrl.u32 %v216, 7
        %v218 = vsub.s32 %v215, %v217
        %v219 = vrot.slane %v203, %v218
        %v221 = vunpack.c.l.s4 1966171168
        %v222 = vunpack.c.0.s8 %v221
        %v223 = vlaneseq
        %v224 = vshrl.u32 %v223, 7
        %v225 = vsub.s32 %v222, %v224
        %v226 = vrot.slane %v204, %v225
        %v228 = vunpack.c.l.s4 1966171168
        %v229 = vunpack.c.0.s8 %v228
        %v230 = vlaneseq
        %v231 = vshrl.u32 %v230, 7
        %v232 = vsub.s32 %v229, %v231
        %v233 = vrot.slane %v205, %v232
        %v234 = vcombine.high %v212, %v212
        %v235 = vcombine.high %v219, %v219
        %v236 = vcombine.high %v226, %v226
        %v237 = vcombine.high %v233, %v233
        %v238 = vlaneseq
        %v239 = vshrl.u32 %v238, 7
        %v240 = vsub.s32 0, %v239
        %v241 = vrot.slane %v212, %v240
        %v242 = vlaneseq
        %v243 = vshrl.u32 %v242, 7
        %v244 = vsub.s32 0, %v243
        %v245 = vrot.slane %v226, %v244
        %v246 = vlaneseq
        %v247 = vshrl.u32 %v246, 7
        %v248 = vsub.s32 0, %v247
        %v249 = vrot.slane %v234, %v248
        %v250 = vlaneseq
        %v251 = vshrl.u32 %v250, 7
        %v252 = vsub.s32 0, %v251
        %v253 = vrot.slane %v236, %v252
        %v254 = vlaneseq
        %v255 = vshrl.u32 %v254, 7
        %v256 = vsub.s32 0, %v255
        %v257 = vrot.slane %v219, %v256
        %v258 = vlaneseq
        %v259 = vshrl.u32 %v258, 7
        %v260 = vsub.s32 0, %v259
        %v261 = vrot.slane %v233, %v260
        %v262 = vlaneseq
        %v263 = vshrl.u32 %v262, 7
        %v264 = vsub.s32 0, %v263
        %v265 = vrot.slane %v235, %v264
        %v266 = vlaneseq
        %v267 = vshrl.u32 %v266, 7
        %v268 = vsub.s32 0, %v267
        %v269 = vrot.slane %v237, %v268
        %vm270 = vcmp.eq.s32.totalorder %v241, %v187
        %vm271 = vcmp.eq.s32.totalorder %v241, %v188
        %vm272 = vcmp.eq.s32.totalorder %v245, %v187
        %vm273 = vcmp.eq.s32.totalorder %v245, %v188
        %vm274 = vcmp.eq.s32.totalorder %v249, %v187
        %vm275 = vcmp.eq.s32.totalorder %v249, %v188
        %vm276 = vcmp.eq.s32.totalorder %v253, %v187
        %vm277 = vcmp.eq.s32.totalorder %v253, %v188
        %vm278 = vcmp.eq.s32.totalorder %v257, %v187
        %vm279 = vcmp.eq.s32.totalorder %v257, %v188
        %vm280 = vcmp.eq.s32.totalorder %v261, %v187
        %vm281 = vcmp.eq.s32.totalorder %v261, %v188
        %vm282 = vcmp.eq.s32.totalorder %v265, %v187
        %vm283 = vcmp.eq.s32.totalorder %v265, %v188
        %vm284 = vcmp.eq.s32.totalorder %v269, %v187
        %vm285 = vcmp.eq.s32.totalorder %v269, %v188
        %v286 = vsel %vm270, 1, 0
        %v287 = vsel %vm271, 1, 0
        %v288 = vsel %vm272, 1, 0
        %v289 = vsel %vm273, 1, 0
        %v290 = vsel %vm274, 1, 0
        %v291 = vsel %vm275, 1, 0
        %v292 = vsel %vm276, 1, 0
        %v293 = vsel %vm277, 1, 0
        %v294 = vsel %vm278, 1, 0
        %v295 = vsel %vm279, 1, 0
        %v296 = vsel %vm280, 1, 0
        %v297 = vsel %vm281, 1, 0
        %v298 = vsel %vm282, 1, 0
        %v299 = vsel %vm283, 1, 0
        %v300 = vsel %vm284, 1, 0
        %v301 = vsel %vm285, 1, 0
        %v302 = vcvt.s32.f32 %v286
        %v303 = vcvt.s32.f32 %v287
        %v304 = vcvt.s32.f32 %v288
        %v305 = vcvt.s32.f32 %v289
        %v306 = vcvt.s32.f32 %v290
        %v307 = vcvt.s32.f32 %v291
        %v308 = vcvt.s32.f32 %v292
        %v309 = vcvt.s32.f32 %v293
        %v310 = vcvt.s32.f32 %v294
        %v311 = vcvt.s32.f32 %v295
        %v312 = vcvt.s32.f32 %v296
        %v313 = vcvt.s32.f32 %v297
        %v314 = vcvt.s32.f32 %v298
        %v315 = vcvt.s32.f32 %v299
        %v316 = vcvt.s32.f32 %v300
        %v317 = vcvt.s32.f32 %v301
        %v318 = vld [vmem:[#allocation5] sm:$0xff]
        %v319 = vld [vmem:[#allocation5 + $0x8] sm:$0xff]
        %vm320 = vcmask 130048
        %v322 = vsel %vm320, %v318, 0
        %v325 = vsel %vm320, %v319, 0
        %327 = vmatprep.subr.mxu0 0.0
        %328 = vmatpush1.msra.mxu0 %v302
        %329 = vmatprep.subr.mxu0 0.0
        %330 = vmatpush1.msra.mxu0 %v303
        %331 = vmatprep.subr.mxu0 0.0
        %332 = vmatpush1.msra.mxu0 0.0
        %333 = vmatprep.subr.mxu0 0.0
        %334 = vmatpush1.msra.mxu0 0.0
        %335 = vmatprep.subr.mxu0 0.0
        %336 = vmatpush1.msra.mxu0 0.0
        %337 = vmatprep.subr.mxu0 0.0
        %338 = vmatpush1.msra.mxu0 0.0
        %339 = vmatprep.subr.mxu0 0.0
        %340 = vmatpush1.msra.mxu0 0.0
        %341 = vmatprep.subr.mxu0 0.0
        %342 = vmatpush1.msra.mxu0 0.0
        %343 = vmatprep.subr.mxu0 0.0
        %344 = vmatpush1.msra.mxu0 0.0
        %345 = vmatprep.subr.mxu0 0.0
        %346 = vmatpush1.msra.mxu0 0.0
        %347 = vmatprep.subr.mxu0 0.0
        %348 = vmatpush1.msra.mxu0 0.0
        %349 = vmatprep.subr.mxu0 0.0
        %350 = vmatpush1.msra.mxu0 0.0
        %351 = vmatprep.subr.mxu0 0.0
        %352 = vmatpush1.msra.mxu0 0.0
        %353 = vmatprep.subr.mxu0 0.0
        %354 = vmatpush1.msra.mxu0 0.0
        %355 = vmatprep.subr.mxu0 0.0
        %356 = vmatpush1.msra.mxu0 0.0
        %357 = vmatprep.subr.mxu0 0.0
        %358 = vmatpush1.msra.mxu0 0.0
        %359 = vmatprep.subr.mxu0 0.0
        %360 = vmatpush1.msra.mxu0 0.0
        %361 = vmatprep.subr.mxu0 0.0
        %362 = vmatpush1.msra.mxu0 0.0
        %363 = vmatprep.subr.mxu0 0.0
        %364 = vmatpush1.msra.mxu0 0.0
        %365 = vmatprep.subr.mxu0 0.0
        %366 = vmatpush1.msra.mxu0 0.0
        %367 = vmatprep.subr.mxu0 0.0
        %368 = vmatpush1.msra.mxu0 0.0
        %369 = vmatprep.subr.mxu0 0.0
        %370 = vmatpush1.msra.mxu0 0.0
        %371 = vmatprep.subr.mxu0 0.0
        %372 = vmatpush1.msra.mxu0 0.0
        %373 = vmatprep.subr.mxu0 0.0
        %374 = vmatpush1.msra.mxu0 0.0
        %375 = vmatprep.subr.mxu0 0.0
        %376 = vmatpush1.msra.mxu0 0.0
        %377 = vmatprep.subr.mxu0 0.0
        %378 = vmatpush1.msra.mxu0 0.0
        %379 = vmatprep.subr.mxu0 0.0
        %380 = vmatpush1.msra.mxu0 0.0
        %381 = vmatprep.subr.mxu0 0.0
        %382 = vmatpush1.msra.mxu0 0.0
        %383 = vmatprep.subr.mxu0 0.0
        %384 = vmatpush1.msra.mxu0 0.0
        %385 = vmatprep.subr.mxu0 0.0
        %386 = vmatpush1.msra.mxu0 0.0
        %387 = vmatprep.subr.mxu0 0.0
        %388 = vmatpush1.msra.mxu0 0.0
        %389 = vmatprep.subr.mxu0 0.0
        %390 = vmatpush1.msra.mxu0 0.0
        %391 = vmatprep.mubr.f32.mxu0 0.0
        %392 = vmatmul.mubr.f32.gmra.mrb[0].mxu0 %v322
        %v393 = vpop.f32.mrb[0].mxu0
        %v394 = vadd.f32 0.0, %v393
        %v395 = vpop.f32.mrb[0].mxu0
        %396 = vmatprep.mubr.f32.mxu0 0.0
        %397 = vmatmul.mubr.f32.gmra.mrb[0].mxu0 %v325
        %v398 = vpop.f32.mrb[0].mxu0
        %v399 = vadd.f32 0.0, %v398
        %v400 = vpop.f32.mrb[0].mxu0
        %401 = vdwg.mxu0
        %402 = vmatprep.subr.mxu0 0.0
        %403 = vmatpush1.msra.mxu0 %v304
        %404 = vmatprep.subr.mxu0 0.0
        %405 = vmatpush1.msra.mxu0 %v305
        %406 = vmatprep.subr.mxu0 0.0
        %407 = vmatpush1.msra.mxu0 0.0
        %408 = vmatprep.subr.mxu0 0.0
        %409 = vmatpush1.msra.mxu0 0.0
        %410 = vmatprep.subr.mxu0 0.0
        %411 = vmatpush1.msra.mxu0 0.0
        %412 = vmatprep.subr.mxu0 0.0
        %413 = vmatpush1.msra.mxu0 0.0
        %414 = vmatprep.subr.mxu0 0.0
        %415 = vmatpush1.msra.mxu0 0.0
        %416 = vmatprep.subr.mxu0 0.0
        %417 = vmatpush1.msra.mxu0 0.0
        %418 = vmatprep.subr.mxu0 0.0
        %419 = vmatpush1.msra.mxu0 0.0
        %420 = vmatprep.subr.mxu0 0.0
        %421 = vmatpush1.msra.mxu0 0.0
        %422 = vmatprep.subr.mxu0 0.0
        %423 = vmatpush1.msra.mxu0 0.0
        %424 = vmatprep.subr.mxu0 0.0
        %425 = vmatpush1.msra.mxu0 0.0
        %426 = vmatprep.subr.mxu0 0.0
        %427 = vmatpush1.msra.mxu0 0.0
        %428 = vmatprep.subr.mxu0 0.0
        %429 = vmatpush1.msra.mxu0 0.0
        %430 = vmatprep.subr.mxu0 0.0
        %431 = vmatpush1.msra.mxu0 0.0
        %432 = vmatprep.subr.mxu0 0.0
        %433 = vmatpush1.msra.mxu0 0.0
        %434 = vmatprep.subr.mxu0 0.0
        %435 = vmatpush1.msra.mxu0 0.0
        %436 = vmatprep.subr.mxu0 0.0
        %437 = vmatpush1.msra.mxu0 0.0
        %438 = vmatprep.subr.mxu0 0.0
        %439 = vmatpush1.msra.mxu0 0.0
        %440 = vmatprep.subr.mxu0 0.0
        %441 = vmatpush1.msra.mxu0 0.0
        %442 = vmatprep.subr.mxu0 0.0
        %443 = vmatpush1.msra.mxu0 0.0
        %444 = vmatprep.subr.mxu0 0.0
        %445 = vmatpush1.msra.mxu0 0.0
        %446 = vmatprep.subr.mxu0 0.0
        %447 = vmatpush1.msra.mxu0 0.0
        %448 = vmatprep.subr.mxu0 0.0
        %449 = vmatpush1.msra.mxu0 0.0
        %450 = vmatprep.subr.mxu0 0.0
        %451 = vmatpush1.msra.mxu0 0.0
        %452 = vmatprep.subr.mxu0 0.0
        %453 = vmatpush1.msra.mxu0 0.0
        %454 = vmatprep.subr.mxu0 0.0
        %455 = vmatpush1.msra.mxu0 0.0
        %456 = vmatprep.subr.mxu0 0.0
        %457 = vmatpush1.msra.mxu0 0.0
        %458 = vmatprep.subr.mxu0 0.0
        %459 = vmatpush1.msra.mxu0 0.0
        %460 = vmatprep.subr.mxu0 0.0
        %461 = vmatpush1.msra.mxu0 0.0
        %462 = vmatprep.subr.mxu0 0.0
        %463 = vmatpush1.msra.mxu0 0.0
        %464 = vmatprep.subr.mxu0 0.0
        %465 = vmatpush1.msra.mxu0 0.0
        %466 = vmatprep.mubr.f32.mxu0 0.0
        %467 = vmatmul.mubr.f32.gmra.mrb[0].mxu0 %v322
        %v468 = vpop.f32.mrb[0].mxu0
        %v469 = vadd.f32 0.0, %v468
        %v470 = vpop.f32.mrb[0].mxu0
        %471 = vmatprep.mubr.f32.mxu0 0.0
        %472 = vmatmul.mubr.f32.gmra.mrb[0].mxu0 %v325
        %v473 = vpop.f32.mrb[0].mxu0
        %v474 = vadd.f32 0.0, %v473
        %v475 = vpop.f32.mrb[0].mxu0
        %476 = vdwg.mxu0
        %477 = vmatprep.subr.mxu0 0.0
        %478 = vmatpush1.msra.mxu0 %v306
        %479 = vmatprep.subr.mxu0 0.0
        %480 = vmatpush1.msra.mxu0 %v307
        %481 = vmatprep.subr.mxu0 0.0
        %482 = vmatpush1.msra.mxu0 0.0
        %483 = vmatprep.subr.mxu0 0.0
        %484 = vmatpush1.msra.mxu0 0.0
        %485 = vmatprep.subr.mxu0 0.0
        %486 = vmatpush1.msra.mxu0 0.0
        %487 = vmatprep.subr.mxu0 0.0
        %488 = vmatpush1.msra.mxu0 0.0
        %489 = vmatprep.subr.mxu0 0.0
        %490 = vmatpush1.msra.mxu0 0.0
        %491 = vmatprep.subr.mxu0 0.0
        %492 = vmatpush1.msra.mxu0 0.0
        %493 = vmatprep.subr.mxu0 0.0
        %494 = vmatpush1.msra.mxu0 0.0
        %495 = vmatprep.subr.mxu0 0.0
        %496 = vmatpush1.msra.mxu0 0.0
        %497 = vmatprep.subr.mxu0 0.0
        %498 = vmatpush1.msra.mxu0 0.0
        %499 = vmatprep.subr.mxu0 0.0
        %500 = vmatpush1.msra.mxu0 0.0
        %501 = vmatprep.subr.mxu0 0.0
        %502 = vmatpush1.msra.mxu0 0.0
        %503 = vmatprep.subr.mxu0 0.0
        %504 = vmatpush1.msra.mxu0 0.0
        %505 = vmatprep.subr.mxu0 0.0
        %506 = vmatpush1.msra.mxu0 0.0
        %507 = vmatprep.subr.mxu0 0.0
        %508 = vmatpush1.msra.mxu0 0.0
        %509 = vmatprep.subr.mxu0 0.0
        %510 = vmatpush1.msra.mxu0 0.0
        %511 = vmatprep.subr.mxu0 0.0
        %512 = vmatpush1.msra.mxu0 0.0
        %513 = vmatprep.subr.mxu0 0.0
        %514 = vmatpush1.msra.mxu0 0.0
        %515 = vmatprep.subr.mxu0 0.0
        %516 = vmatpush1.msra.mxu0 0.0
        %517 = vmatprep.subr.mxu0 0.0
        %518 = vmatpush1.msra.mxu0 0.0
        %519 = vmatprep.subr.mxu0 0.0
        %520 = vmatpush1.msra.mxu0 0.0
        %521 = vmatprep.subr.mxu0 0.0
        %522 = vmatpush1.msra.mxu0 0.0
        %523 = vmatprep.subr.mxu0 0.0
        %524 = vmatpush1.msra.mxu0 0.0
        %525 = vmatprep.subr.mxu0 0.0
        %526 = vmatpush1.msra.mxu0 0.0
        %527 = vmatprep.subr.mxu0 0.0
        %528 = vmatpush1.msra.mxu0 0.0
        %529 = vmatprep.subr.mxu0 0.0
        %530 = vmatpush1.msra.mxu0 0.0
        %531 = vmatprep.subr.mxu0 0.0
        %532 = vmatpush1.msra.mxu0 0.0
        %533 = vmatprep.subr.mxu0 0.0
        %534 = vmatpush1.msra.mxu0 0.0
        %535 = vmatprep.subr.mxu0 0.0
        %536 = vmatpush1.msra.mxu0 0.0
        %537 = vmatprep.subr.mxu0 0.0
        %538 = vmatpush1.msra.mxu0 0.0
        %539 = vmatprep.subr.mxu0 0.0
        %540 = vmatpush1.msra.mxu0 0.0
        %541 = vmatprep.mubr.f32.mxu0 0.0
        %542 = vmatmul.mubr.f32.gmra.mrb[0].mxu0 %v322
        %v543 = vpop.f32.mrb[0].mxu0
        %v544 = vadd.f32 0.0, %v543
        %v545 = vpop.f32.mrb[0].mxu0
        %546 = vmatprep.mubr.f32.mxu0 0.0
        %547 = vmatmul.mubr.f32.gmra.mrb[0].mxu0 %v325
        %v548 = vpop.f32.mrb[0].mxu0
        %v549 = vadd.f32 0.0, %v548
        %v550 = vpop.f32.mrb[0].mxu0
        %551 = vdwg.mxu0
        %552 = vmatprep.subr.mxu0 0.0
        %553 = vmatpush1.msra.mxu0 %v308
        %554 = vmatprep.subr.mxu0 0.0
        %555 = vmatpush1.msra.mxu0 %v309
        %556 = vmatprep.subr.mxu0 0.0
        %557 = vmatpush1.msra.mxu0 0.0
        %558 = vmatprep.subr.mxu0 0.0
        %559 = vmatpush1.msra.mxu0 0.0
        %560 = vmatprep.subr.mxu0 0.0
        %561 = vmatpush1.msra.mxu0 0.0
        %562 = vmatprep.subr.mxu0 0.0
        %563 = vmatpush1.msra.mxu0 0.0
        %564 = vmatprep.subr.mxu0 0.0
        %565 = vmatpush1.msra.mxu0 0.0
        %566 = vmatprep.subr.mxu0 0.0
        %567 = vmatpush1.msra.mxu0 0.0
        %568 = vmatprep.subr.mxu0 0.0
        %569 = vmatpush1.msra.mxu0 0.0
        %570 = vmatprep.subr.mxu0 0.0
        %571 = vmatpush1.msra.mxu0 0.0
        %572 = vmatprep.subr.mxu0 0.0
        %573 = vmatpush1.msra.mxu0 0.0
        %574 = vmatprep.subr.mxu0 0.0
        %575 = vmatpush1.msra.mxu0 0.0
        %576 = vmatprep.subr.mxu0 0.0
        %577 = vmatpush1.msra.mxu0 0.0
        %578 = vmatprep.subr.mxu0 0.0
        %579 = vmatpush1.msra.mxu0 0.0
        %580 = vmatprep.subr.mxu0 0.0
        %581 = vmatpush1.msra.mxu0 0.0
        %582 = vmatprep.subr.mxu0 0.0
        %583 = vmatpush1.msra.mxu0 0.0
        %584 = vmatprep.subr.mxu0 0.0
        %585 = vmatpush1.msra.mxu0 0.0
        %586 = vmatprep.subr.mxu0 0.0
        %587 = vmatpush1.msra.mxu0 0.0
        %588 = vmatprep.subr.mxu0 0.0
        %589 = vmatpush1.msra.mxu0 0.0
        %590 = vmatprep.subr.mxu0 0.0
        %591 = vmatpush1.msra.mxu0 0.0
        %592 = vmatprep.subr.mxu0 0.0
        %593 = vmatpush1.msra.mxu0 0.0
        %594 = vmatprep.subr.mxu0 0.0
        %595 = vmatpush1.msra.mxu0 0.0
        %596 = vmatprep.subr.mxu0 0.0
        %597 = vmatpush1.msra.mxu0 0.0
        %598 = vmatprep.subr.mxu0 0.0
        %599 = vmatpush1.msra.mxu0 0.0
        %600 = vmatprep.subr.mxu0 0.0
        %601 = vmatpush1.msra.mxu0 0.0
        %602 = vmatprep.subr.mxu0 0.0
        %603 = vmatpush1.msra.mxu0 0.0
        %604 = vmatprep.subr.mxu0 0.0
        %605 = vmatpush1.msra.mxu0 0.0
        %606 = vmatprep.subr.mxu0 0.0
        %607 = vmatpush1.msra.mxu0 0.0
        %608 = vmatprep.subr.mxu0 0.0
        %609 = vmatpush1.msra.mxu0 0.0
        %610 = vmatprep.subr.mxu0 0.0
        %611 = vmatpush1.msra.mxu0 0.0
        %612 = vmatprep.subr.mxu0 0.0
        %613 = vmatpush1.msra.mxu0 0.0
        %614 = vmatprep.subr.mxu0 0.0
        %615 = vmatpush1.msra.mxu0 0.0
        %616 = vmatprep.mubr.f32.mxu0 0.0
        %617 = vmatmul.mubr.f32.gmra.mrb[0].mxu0 %v322
        %v618 = vpop.f32.mrb[0].mxu0
        %v619 = vadd.f32 0.0, %v618
        %v620 = vpop.f32.mrb[0].mxu0
        %621 = vmatprep.mubr.f32.mxu0 0.0
        %622 = vmatmul.mubr.f32.gmra.mrb[0].mxu0 %v325
        %v623 = vpop.f32.mrb[0].mxu0
        %v624 = vadd.f32 0.0, %v623
        %v625 = vpop.f32.mrb[0].mxu0
        %626 = vdwg.mxu0
        %627 = vmatprep.subr.mxu0 0.0
        %628 = vmatpush1.msra.mxu0 %v310
        %629 = vmatprep.subr.mxu0 0.0
        %630 = vmatpush1.msra.mxu0 %v311
        %631 = vmatprep.subr.mxu0 0.0
        %632 = vmatpush1.msra.mxu0 0.0
        %633 = vmatprep.subr.mxu0 0.0
        %634 = vmatpush1.msra.mxu0 0.0
        %635 = vmatprep.subr.mxu0 0.0
        %636 = vmatpush1.msra.mxu0 0.0
        %637 = vmatprep.subr.mxu0 0.0
        %638 = vmatpush1.msra.mxu0 0.0
        %639 = vmatprep.subr.mxu0 0.0
        %640 = vmatpush1.msra.mxu0 0.0
        %641 = vmatprep.subr.mxu0 0.0
        %642 = vmatpush1.msra.mxu0 0.0
        %643 = vmatprep.subr.mxu0 0.0
        %644 = vmatpush1.msra.mxu0 0.0
        %645 = vmatprep.subr.mxu0 0.0
        %646 = vmatpush1.msra.mxu0 0.0
        %647 = vmatprep.subr.mxu0 0.0
        %648 = vmatpush1.msra.mxu0 0.0
        %649 = vmatprep.subr.mxu0 0.0
        %650 = vmatpush1.msra.mxu0 0.0
        %651 = vmatprep.subr.mxu0 0.0
        %652 = vmatpush1.msra.mxu0 0.0
        %653 = vmatprep.subr.mxu0 0.0
        %654 = vmatpush1.msra.mxu0 0.0
        %655 = vmatprep.subr.mxu0 0.0
        %656 = vmatpush1.msra.mxu0 0.0
        %657 = vmatprep.subr.mxu0 0.0
        %658 = vmatpush1.msra.mxu0 0.0
        %659 = vmatprep.subr.mxu0 0.0
        %660 = vmatpush1.msra.mxu0 0.0
        %661 = vmatprep.subr.mxu0 0.0
        %662 = vmatpush1.msra.mxu0 0.0
        %663 = vmatprep.subr.mxu0 0.0
        %664 = vmatpush1.msra.mxu0 0.0
        %665 = vmatprep.subr.mxu0 0.0
        %666 = vmatpush1.msra.mxu0 0.0
        %667 = vmatprep.subr.mxu0 0.0
        %668 = vmatpush1.msra.mxu0 0.0
        %669 = vmatprep.subr.mxu0 0.0
        %670 = vmatpush1.msra.mxu0 0.0
        %671 = vmatprep.subr.mxu0 0.0
        %672 = vmatpush1.msra.mxu0 0.0
        %673 = vmatprep.subr.mxu0 0.0
        %674 = vmatpush1.msra.mxu0 0.0
        %675 = vmatprep.subr.mxu0 0.0
        %676 = vmatpush1.msra.mxu0 0.0
        %677 = vmatprep.subr.mxu0 0.0
        %678 = vmatpush1.msra.mxu0 0.0
        %679 = vmatprep.subr.mxu0 0.0
        %680 = vmatpush1.msra.mxu0 0.0
        %681 = vmatprep.subr.mxu0 0.0
        %682 = vmatpush1.msra.mxu0 0.0
        %683 = vmatprep.subr.mxu0 0.0
        %684 = vmatpush1.msra.mxu0 0.0
        %685 = vmatprep.subr.mxu0 0.0
        %686 = vmatpush1.msra.mxu0 0.0
        %687 = vmatprep.subr.mxu0 0.0
        %688 = vmatpush1.msra.mxu0 0.0
        %689 = vmatprep.subr.mxu0 0.0
        %690 = vmatpush1.msra.mxu0 0.0
        %691 = vmatprep.mubr.f32.mxu0 0.0
        %692 = vmatmul.mubr.f32.gmra.mrb[0].mxu0 %v322
        %v693 = vpop.f32.mrb[0].mxu0
        %v694 = vadd.f32 0.0, %v693
        %v695 = vpop.f32.mrb[0].mxu0
        %696 = vmatprep.mubr.f32.mxu0 0.0
        %697 = vmatmul.mubr.f32.gmra.mrb[0].mxu0 %v325
        %v698 = vpop.f32.mrb[0].mxu0
        %v699 = vadd.f32 0.0, %v698
        %v700 = vpop.f32.mrb[0].mxu0
        %701 = vdwg.mxu0
        %702 = vmatprep.subr.mxu0 0.0
        %703 = vmatpush1.msra.mxu0 %v312
        %704 = vmatprep.subr.mxu0 0.0
        %705 = vmatpush1.msra.mxu0 %v313
        %706 = vmatprep.subr.mxu0 0.0
        %707 = vmatpush1.msra.mxu0 0.0
        %708 = vmatprep.subr.mxu0 0.0
        %709 = vmatpush1.msra.mxu0 0.0
        %710 = vmatprep.subr.mxu0 0.0
        %711 = vmatpush1.msra.mxu0 0.0
        %712 = vmatprep.subr.mxu0 0.0
        %713 = vmatpush1.msra.mxu0 0.0
        %714 = vmatprep.subr.mxu0 0.0
        %715 = vmatpush1.msra.mxu0 0.0
        %716 = vmatprep.subr.mxu0 0.0
        %717 = vmatpush1.msra.mxu0 0.0
        %718 = vmatprep.subr.mxu0 0.0
        %719 = vmatpush1.msra.mxu0 0.0
        %720 = vmatprep.subr.mxu0 0.0
        %721 = vmatpush1.msra.mxu0 0.0
        %722 = vmatprep.subr.mxu0 0.0
        %723 = vmatpush1.msra.mxu0 0.0
        %724 = vmatprep.subr.mxu0 0.0
        %725 = vmatpush1.msra.mxu0 0.0
        %726 = vmatprep.subr.mxu0 0.0
        %727 = vmatpush1.msra.mxu0 0.0
        %728 = vmatprep.subr.mxu0 0.0
        %729 = vmatpush1.msra.mxu0 0.0
        %730 = vmatprep.subr.mxu0 0.0
        %731 = vmatpush1.msra.mxu0 0.0
        %732 = vmatprep.subr.mxu0 0.0
        %733 = vmatpush1.msra.mxu0 0.0
        %734 = vmatprep.subr.mxu0 0.0
        %735 = vmatpush1.msra.mxu0 0.0
        %736 = vmatprep.subr.mxu0 0.0
        %737 = vmatpush1.msra.mxu0 0.0
        %738 = vmatprep.subr.mxu0 0.0
        %739 = vmatpush1.msra.mxu0 0.0
        %740 = vmatprep.subr.mxu0 0.0
        %741 = vmatpush1.msra.mxu0 0.0
        %742 = vmatprep.subr.mxu0 0.0
        %743 = vmatpush1.msra.mxu0 0.0
        %744 = vmatprep.subr.mxu0 0.0
        %745 = vmatpush1.msra.mxu0 0.0
        %746 = vmatprep.subr.mxu0 0.0
        %747 = vmatpush1.msra.mxu0 0.0
        %748 = vmatprep.subr.mxu0 0.0
        %749 = vmatpush1.msra.mxu0 0.0
        %750 = vmatprep.subr.mxu0 0.0
        %751 = vmatpush1.msra.mxu0 0.0
        %752 = vmatprep.subr.mxu0 0.0
        %753 = vmatpush1.msra.mxu0 0.0
        %754 = vmatprep.subr.mxu0 0.0
        %755 = vmatpush1.msra.mxu0 0.0
        %756 = vmatprep.subr.mxu0 0.0
        %757 = vmatpush1.msra.mxu0 0.0
        %758 = vmatprep.subr.mxu0 0.0
        %759 = vmatpush1.msra.mxu0 0.0
        %760 = vmatprep.subr.mxu0 0.0
        %761 = vmatpush1.msra.mxu0 0.0
        %762 = vmatprep.subr.mxu0 0.0
        %763 = vmatpush1.msra.mxu0 0.0
        %764 = vmatprep.subr.mxu0 0.0
        %765 = vmatpush1.msra.mxu0 0.0
        %766 = vmatprep.mubr.f32.mxu0 0.0
        %767 = vmatmul.mubr.f32.gmra.mrb[0].mxu0 %v322
        %v768 = vpop.f32.mrb[0].mxu0
        %v769 = vadd.f32 0.0, %v768
        %v770 = vpop.f32.mrb[0].mxu0
        %771 = vmatprep.mubr.f32.mxu0 0.0
        %772 = vmatmul.mubr.f32.gmra.mrb[0].mxu0 %v325
        %v773 = vpop.f32.mrb[0].mxu0
        %v774 = vadd.f32 0.0, %v773
        %v775 = vpop.f32.mrb[0].mxu0
        %776 = vdwg.mxu0
        %777 = vmatprep.subr.mxu0 0.0
        %778 = vmatpush1.msra.mxu0 %v314
        %779 = vmatprep.subr.mxu0 0.0
        %780 = vmatpush1.msra.mxu0 %v315
        %781 = vmatprep.subr.mxu0 0.0
        %782 = vmatpush1.msra.mxu0 0.0
        %783 = vmatprep.subr.mxu0 0.0
        %784 = vmatpush1.msra.mxu0 0.0
        %785 = vmatprep.subr.mxu0 0.0
        %786 = vmatpush1.msra.mxu0 0.0
        %787 = vmatprep.subr.mxu0 0.0
        %788 = vmatpush1.msra.mxu0 0.0
        %789 = vmatprep.subr.mxu0 0.0
        %790 = vmatpush1.msra.mxu0 0.0
        %791 = vmatprep.subr.mxu0 0.0
        %792 = vmatpush1.msra.mxu0 0.0
        %793 = vmatprep.subr.mxu0 0.0
        %794 = vmatpush1.msra.mxu0 0.0
        %795 = vmatprep.subr.mxu0 0.0
        %796 = vmatpush1.msra.mxu0 0.0
        %797 = vmatprep.subr.mxu0 0.0
        %798 = vmatpush1.msra.mxu0 0.0
        %799 = vmatprep.subr.mxu0 0.0
        %800 = vmatpush1.msra.mxu0 0.0
        %801 = vmatprep.subr.mxu0 0.0
        %802 = vmatpush1.msra.mxu0 0.0
        %803 = vmatprep.subr.mxu0 0.0
        %804 = vmatpush1.msra.mxu0 0.0
        %805 = vmatprep.subr.mxu0 0.0
        %806 = vmatpush1.msra.mxu0 0.0
        %807 = vmatprep.subr.mxu0 0.0
        %808 = vmatpush1.msra.mxu0 0.0
        %809 = vmatprep.subr.mxu0 0.0
        %810 = vmatpush1.msra.mxu0 0.0
        %811 = vmatprep.subr.mxu0 0.0
        %812 = vmatpush1.msra.mxu0 0.0
        %813 = vmatprep.subr.mxu0 0.0
        %814 = vmatpush1.msra.mxu0 0.0
        %815 = vmatprep.subr.mxu0 0.0
        %816 = vmatpush1.msra.mxu0 0.0
        %817 = vmatprep.subr.mxu0 0.0
        %818 = vmatpush1.msra.mxu0 0.0
        %819 = vmatprep.subr.mxu0 0.0
        %820 = vmatpush1.msra.mxu0 0.0
        %821 = vmatprep.subr.mxu0 0.0
        %822 = vmatpush1.msra.mxu0 0.0
        %823 = vmatprep.subr.mxu0 0.0
        %824 = vmatpush1.msra.mxu0 0.0
        %825 = vmatprep.subr.mxu0 0.0
        %826 = vmatpush1.msra.mxu0 0.0
        %827 = vmatprep.subr.mxu0 0.0
        %828 = vmatpush1.msra.mxu0 0.0
        %829 = vmatprep.subr.mxu0 0.0
        %830 = vmatpush1.msra.mxu0 0.0
        %831 = vmatprep.subr.mxu0 0.0
        %832 = vmatpush1.msra.mxu0 0.0
        %833 = vmatprep.subr.mxu0 0.0
        %834 = vmatpush1.msra.mxu0 0.0
        %835 = vmatprep.subr.mxu0 0.0
        %836 = vmatpush1.msra.mxu0 0.0
        %837 = vmatprep.subr.mxu0 0.0
        %838 = vmatpush1.msra.mxu0 0.0
        %839 = vmatprep.subr.mxu0 0.0
        %840 = vmatpush1.msra.mxu0 0.0
        %841 = vmatprep.mubr.f32.mxu0 0.0
        %842 = vmatmul.mubr.f32.gmra.mrb[0].mxu0 %v322
        %v843 = vpop.f32.mrb[0].mxu0
        %v844 = vadd.f32 0.0, %v843
        %v845 = vpop.f32.mrb[0].mxu0
        %846 = vmatprep.mubr.f32.mxu0 0.0
        %847 = vmatmul.mubr.f32.gmra.mrb[0].mxu0 %v325
        %v848 = vpop.f32.mrb[0].mxu0
        %v849 = vadd.f32 0.0, %v848
        %v850 = vpop.f32.mrb[0].mxu0
        %851 = vdwg.mxu0
        %852 = vmatprep.subr.mxu0 0.0
        %853 = vmatpush1.msra.mxu0 %v316
        %854 = vmatprep.subr.mxu0 0.0
        %855 = vmatpush1.msra.mxu0 %v317
        %856 = vmatprep.subr.mxu0 0.0
        %857 = vmatpush1.msra.mxu0 0.0
        %858 = vmatprep.subr.mxu0 0.0
        %859 = vmatpush1.msra.mxu0 0.0
        %860 = vmatprep.subr.mxu0 0.0
        %861 = vmatpush1.msra.mxu0 0.0
        %862 = vmatprep.subr.mxu0 0.0
        %863 = vmatpush1.msra.mxu0 0.0
        %864 = vmatprep.subr.mxu0 0.0
        %865 = vmatpush1.msra.mxu0 0.0
        %866 = vmatprep.subr.mxu0 0.0
        %867 = vmatpush1.msra.mxu0 0.0
        %868 = vmatprep.subr.mxu0 0.0
        %869 = vmatpush1.msra.mxu0 0.0
        %870 = vmatprep.subr.mxu0 0.0
        %871 = vmatpush1.msra.mxu0 0.0
        %872 = vmatprep.subr.mxu0 0.0
        %873 = vmatpush1.msra.mxu0 0.0
        %874 = vmatprep.subr.mxu0 0.0
        %875 = vmatpush1.msra.mxu0 0.0
        %876 = vmatprep.subr.mxu0 0.0
        %877 = vmatpush1.msra.mxu0 0.0
        %878 = vmatprep.subr.mxu0 0.0
        %879 = vmatpush1.msra.mxu0 0.0
        %880 = vmatprep.subr.mxu0 0.0
        %881 = vmatpush1.msra.mxu0 0.0
        %882 = vmatprep.subr.mxu0 0.0
        %883 = vmatpush1.msra.mxu0 0.0
        %884 = vmatprep.subr.mxu0 0.0
        %885 = vmatpush1.msra.mxu0 0.0
        %886 = vmatprep.subr.mxu0 0.0
        %887 = vmatpush1.msra.mxu0 0.0
        %888 = vmatprep.subr.mxu0 0.0
        %889 = vmatpush1.msra.mxu0 0.0
        %890 = vmatprep.subr.mxu0 0.0
        %891 = vmatpush1.msra.mxu0 0.0
        %892 = vmatprep.subr.mxu0 0.0
        %893 = vmatpush1.msra.mxu0 0.0
        %894 = vmatprep.subr.mxu0 0.0
        %895 = vmatpush1.msra.mxu0 0.0
        %896 = vmatprep.subr.mxu0 0.0
        %897 = vmatpush1.msra.mxu0 0.0
        %898 = vmatprep.subr.mxu0 0.0
        %899 = vmatpush1.msra.mxu0 0.0
        %900 = vmatprep.subr.mxu0 0.0
        %901 = vmatpush1.msra.mxu0 0.0
        %902 = vmatprep.subr.mxu0 0.0
        %903 = vmatpush1.msra.mxu0 0.0
        %904 = vmatprep.subr.mxu0 0.0
        %905 = vmatpush1.msra.mxu0 0.0
        %906 = vmatprep.subr.mxu0 0.0
        %907 = vmatpush1.msra.mxu0 0.0
        %908 = vmatprep.subr.mxu0 0.0
        %909 = vmatpush1.msra.mxu0 0.0
        %910 = vmatprep.subr.mxu0 0.0
        %911 = vmatpush1.msra.mxu0 0.0
        %912 = vmatprep.subr.mxu0 0.0
        %913 = vmatpush1.msra.mxu0 0.0
        %914 = vmatprep.subr.mxu0 0.0
        %915 = vmatpush1.msra.mxu0 0.0
        %916 = vmatprep.mubr.f32.mxu0 0.0
        %917 = vmatmul.mubr.f32.gmra.mrb[0].mxu0 %v322
        %v918 = vpop.f32.mrb[0].mxu0
        %v919 = vadd.f32 0.0, %v918
        %v920 = vpop.f32.mrb[0].mxu0
        %921 = vmatprep.mubr.f32.mxu0 0.0
        %922 = vmatmul.mubr.f32.gmra.mrb[0].mxu0 %v325
        %v923 = vpop.f32.mrb[0].mxu0
        %v924 = vadd.f32 0.0, %v923
        %v925 = vpop.f32.mrb[0].mxu0
        %926 = vdwg.mxu0
        %v927 = vcombine.high %v185, %v185
        %v929 = vunpack.c.l.s4 1966171168
        %v930 = vunpack.c.0.s8 %v929
        %v931 = vlaneseq
        %v932 = vshrl.u32 %v931, 7
        %v933 = vsub.s32 %v930, %v932
        %v934 = vrot.slane %v185, %v933
        %v936 = vunpack.c.l.s4 1966171168
        %v937 = vunpack.c.0.s8 %v936
        %v938 = vlaneseq
        %v939 = vshrl.u32 %v938, 7
        %v940 = vsub.s32 %v937, %v939
        %v941 = vrot.slane %v927, %v940
        %v942 = vcombine.high %v934, %v934
        %v943 = vcombine.high %v941, %v941
        %v945 = vunpack.c.l.s4 1966171168
        %v946 = vunpack.c.0.s8 %v945
        %v947 = vlaneseq
        %v948 = vshrl.u32 %v947, 7
        %v949 = vsub.s32 %v946, %v948
        %v950 = vrot.slane %v934, %v949
        %v952 = vunpack.c.l.s4 1966171168
        %v953 = vunpack.c.0.s8 %v952
        %v954 = vlaneseq
        %v955 = vshrl.u32 %v954, 7
        %v956 = vsub.s32 %v953, %v955
        %v957 = vrot.slane %v941, %v956
        %v959 = vunpack.c.l.s4 1966171168
        %v960 = vunpack.c.0.s8 %v959
        %v961 = vlaneseq
        %v962 = vshrl.u32 %v961, 7
        %v963 = vsub.s32 %v960, %v962
        %v964 = vrot.slane %v942, %v963
        %v966 = vunpack.c.l.s4 1966171168
        %v967 = vunpack.c.0.s8 %v966
        %v968 = vlaneseq
        %v969 = vshrl.u32 %v968, 7
        %v970 = vsub.s32 %v967, %v969
        %v971 = vrot.slane %v943, %v970
        %v972 = vcombine.high %v950, %v950
        %v973 = vcombine.high %v957, %v957
        %v974 = vcombine.high %v964, %v964
        %v975 = vcombine.high %v971, %v971
        %v976 = vlaneseq
        %v977 = vshrl.u32 %v976, 7
        %v978 = vsub.s32 0, %v977
        %v979 = vrot.slane %v950, %v978
        %v980 = vlaneseq
        %v981 = vshrl.u32 %v980, 7
        %v982 = vsub.s32 0, %v981
        %v983 = vrot.slane %v964, %v982
        %v984 = vlaneseq
        %v985 = vshrl.u32 %v984, 7
        %v986 = vsub.s32 0, %v985
        %v987 = vrot.slane %v972, %v986
        %v988 = vlaneseq
        %v989 = vshrl.u32 %v988, 7
        %v990 = vsub.s32 0, %v989
        %v991 = vrot.slane %v974, %v990
        %v992 = vlaneseq
        %v993 = vshrl.u32 %v992, 7
        %v994 = vsub.s32 0, %v993
        %v995 = vrot.slane %v957, %v994
        %v996 = vlaneseq
        %v997 = vshrl.u32 %v996, 7
        %v998 = vsub.s32 0, %v997
        %v999 = vrot.slane %v971, %v998
        %v1000 = vlaneseq
        %v1001 = vshrl.u32 %v1000, 7
        %v1002 = vsub.s32 0, %v1001
        %v1003 = vrot.slane %v973, %v1002
        %v1004 = vlaneseq
        %v1005 = vshrl.u32 %v1004, 7
        %v1006 = vsub.s32 0, %v1005
        %v1007 = vrot.slane %v975, %v1006
        %vm1008 = vcmp.eq.s32.totalorder %v979, %v187
        %vm1009 = vcmp.eq.s32.totalorder %v979, %v188
        %vm1010 = vcmp.eq.s32.totalorder %v983, %v187
        %vm1011 = vcmp.eq.s32.totalorder %v983, %v188
        %vm1012 = vcmp.eq.s32.totalorder %v987, %v187
        %vm1013 = vcmp.eq.s32.totalorder %v987, %v188
        %vm1014 = vcmp.eq.s32.totalorder %v991, %v187
        %vm1015 = vcmp.eq.s32.totalorder %v991, %v188
        %vm1016 = vcmp.eq.s32.totalorder %v995, %v187
        %vm1017 = vcmp.eq.s32.totalorder %v995, %v188
        %vm1018 = vcmp.eq.s32.totalorder %v999, %v187
        %vm1019 = vcmp.eq.s32.totalorder %v999, %v188
        %vm1020 = vcmp.eq.s32.totalorder %v1003, %v187
        %vm1021 = vcmp.eq.s32.totalorder %v1003, %v188
        %vm1022 = vcmp.eq.s32.totalorder %v1007, %v187
        %vm1023 = vcmp.eq.s32.totalorder %v1007, %v188
        %v1024 = vsel %vm1008, %v394, 0.0
        %v1025 = vsel %vm1009, %v399, 0.0
        %v1026 = vsel %vm1010, %v469, 0.0
        %v1027 = vsel %vm1011, %v474, 0.0
        %v1028 = vsel %vm1012, %v544, 0.0
        %v1029 = vsel %vm1013, %v549, 0.0
        %v1030 = vsel %vm1014, %v619, 0.0
        %v1031 = vsel %vm1015, %v624, 0.0
        %v1032 = vsel %vm1016, %v694, 0.0
        %v1033 = vsel %vm1017, %v699, 0.0
        %v1034 = vsel %vm1018, %v769, 0.0
        %v1035 = vsel %vm1019, %v774, 0.0
        %v1036 = vsel %vm1020, %v844, 0.0
        %v1037 = vsel %vm1021, %v849, 0.0
        %v1038 = vsel %vm1022, %v919, 0.0
        %v1039 = vsel %vm1023, %v924, 0.0
        %v1040 = vadd.f32 %v1024, %v1025
        %v1041 = vrot.slane %v1040, 4
        %v1042 = vadd.f32 %v1040, %v1041
        %v1043 = vrot.slane %v1042, 2
        %v1044 = vadd.f32 %v1042, %v1043
        %v1045 = vrot.slane %v1044, 1
        %v1046 = vadd.f32 %v1044, %v1045
        %v1047 = vadd.f32 %v1026, %v1027
        %v1048 = vrot.slane %v1047, 4
        %v1049 = vadd.f32 %v1047, %v1048
        %v1050 = vrot.slane %v1049, 2
        %v1051 = vadd.f32 %v1049, %v1050
        %v1052 = vrot.slane %v1051, 1
        %v1053 = vadd.f32 %v1051, %v1052
        %v1054 = vadd.f32 %v1028, %v1029
        %v1055 = vrot.slane %v1054, 4
        %v1056 = vadd.f32 %v1054, %v1055
        %v1057 = vrot.slane %v1056, 2
        %v1058 = vadd.f32 %v1056, %v1057
        %v1059 = vrot.slane %v1058, 1
        %v1060 = vadd.f32 %v1058, %v1059
        %v1061 = vadd.f32 %v1030, %v1031
        %v1062 = vrot.slane %v1061, 4
        %v1063 = vadd.f32 %v1061, %v1062
        %v1064 = vrot.slane %v1063, 2
        %v1065 = vadd.f32 %v1063, %v1064
        %v1066 = vrot.slane %v1065, 1
        %v1067 = vadd.f32 %v1065, %v1066
        %v1068 = vadd.f32 %v1032, %v1033
        %v1069 = vrot.slane %v1068, 4
        %v1070 = vadd.f32 %v1068, %v1069
        %v1071 = vrot.slane %v1070, 2
        %v1072 = vadd.f32 %v1070, %v1071
        %v1073 = vrot.slane %v1072, 1
        %v1074 = vadd.f32 %v1072, %v1073
        %v1075 = vadd.f32 %v1034, %v1035
        %v1076 = vrot.slane %v1075, 4
        %v1077 = vadd.f32 %v1075, %v1076
        %v1078 = vrot.slane %v1077, 2
        %v1079 = vadd.f32 %v1077, %v1078
        %v1080 = vrot.slane %v1079, 1
        %v1081 = vadd.f32 %v1079, %v1080
        %v1082 = vadd.f32 %v1036, %v1037
        %v1083 = vrot.slane %v1082, 4
        %v1084 = vadd.f32 %v1082, %v1083
        %v1085 = vrot.slane %v1084, 2
        %v1086 = vadd.f32 %v1084, %v1085
        %v1087 = vrot.slane %v1086, 1
        %v1088 = vadd.f32 %v1086, %v1087
        %v1089 = vadd.f32 %v1038, %v1039
        %v1090 = vrot.slane %v1089, 4
        %v1091 = vadd.f32 %v1089, %v1090
        %v1092 = vrot.slane %v1091, 2
        %v1093 = vadd.f32 %v1091, %v1092
        %v1094 = vrot.slane %v1093, 1
        %v1095 = vadd.f32 %v1093, %v1094
        %v1096 = vmul.u32 %v179, 8
        %v1097 = vadd.s32 %v1096, %v187
        %v1098 = vcombine.high %v1097, %v1097
        %v1100 = vunpack.c.l.s4 1966171168
        %v1101 = vunpack.c.0.s8 %v1100
        %v1102 = vlaneseq
        %v1103 = vshrl.u32 %v1102, 7
        %v1104 = vsub.s32 %v1101, %v1103
        %v1105 = vrot.slane %v1097, %v1104
        %v1107 = vunpack.c.l.s4 1966171168
        %v1108 = vunpack.c.0.s8 %v1107
        %v1109 = vlaneseq
        %v1110 = vshrl.u32 %v1109, 7
        %v1111 = vsub.s32 %v1108, %v1110
        %v1112 = vrot.slane %v1098, %v1111
        %v1113 = vcombine.high %v1105, %v1105
        %v1114 = vcombine.high %v1112, %v1112
        %v1116 = vunpack.c.l.s4 1966171168
        %v1117 = vunpack.c.0.s8 %v1116
        %v1118 = vlaneseq
        %v1119 = vshrl.u32 %v1118, 7
        %v1120 = vsub.s32 %v1117, %v1119
        %v1121 = vrot.slane %v1105, %v1120
        %v1123 = vunpack.c.l.s4 1966171168
        %v1124 = vunpack.c.0.s8 %v1123
        %v1125 = vlaneseq
        %v1126 = vshrl.u32 %v1125, 7
        %v1127 = vsub.s32 %v1124, %v1126
        %v1128 = vrot.slane %v1112, %v1127
        %v1130 = vunpack.c.l.s4 1966171168
        %v1131 = vunpack.c.0.s8 %v1130
        %v1132 = vlaneseq
        %v1133 = vshrl.u32 %v1132, 7
        %v1134 = vsub.s32 %v1131, %v1133
        %v1135 = vrot.slane %v1113, %v1134
        %v1137 = vunpack.c.l.s4 1966171168
        %v1138 = vunpack.c.0.s8 %v1137
        %v1139 = vlaneseq
        %v1140 = vshrl.u32 %v1139, 7
        %v1141 = vsub.s32 %v1138, %v1140
        %v1142 = vrot.slane %v1114, %v1141
        %v1143 = vcombine.high %v1121, %v1121
        %v1144 = vcombine.high %v1128, %v1128
        %v1145 = vcombine.high %v1135, %v1135
        %v1146 = vcombine.high %v1142, %v1142
        %v1147 = vlaneseq
        %v1148 = vshrl.u32 %v1147, 7
        %v1149 = vsub.s32 0, %v1148
        %v1150 = vrot.slane %v1121, %v1149
        %v1151 = vlaneseq
        %v1152 = vshrl.u32 %v1151, 7
        %v1153 = vsub.s32 0, %v1152
        %v1154 = vrot.slane %v1135, %v1153
        %v1155 = vlaneseq
        %v1156 = vshrl.u32 %v1155, 7
        %v1157 = vsub.s32 0, %v1156
        %v1158 = vrot.slane %v1143, %v1157
        %v1159 = vlaneseq
        %v1160 = vshrl.u32 %v1159, 7
        %v1161 = vsub.s32 0, %v1160
        %v1162 = vrot.slane %v1145, %v1161
        %v1163 = vlaneseq
        %v1164 = vshrl.u32 %v1163, 7
        %v1165 = vsub.s32 0, %v1164
        %v1166 = vrot.slane %v1128, %v1165
        %v1167 = vlaneseq
        %v1168 = vshrl.u32 %v1167, 7
        %v1169 = vsub.s32 0, %v1168
        %v1170 = vrot.slane %v1142, %v1169
        %v1171 = vlaneseq
        %v1172 = vshrl.u32 %v1171, 7
        %v1173 = vsub.s32 0, %v1172
        %v1174 = vrot.slane %v1144, %v1173
        %v1175 = vlaneseq
        %v1176 = vshrl.u32 %v1175, 7
        %v1177 = vsub.s32 0, %v1176
        %v1178 = vrot.slane %v1146, %v1177
        %vm1179 = vcmp.lt.s32.totalorder %v1150, %v1097
        %vm1180 = vcmp.lt.s32.totalorder %v1154, %v1097
        %vm1181 = vcmp.lt.s32.totalorder %v1158, %v1097
        %vm1182 = vcmp.lt.s32.totalorder %v1162, %v1097
        %vm1183 = vcmp.lt.s32.totalorder %v1166, %v1097
        %vm1184 = vcmp.lt.s32.totalorder %v1170, %v1097
        %vm1185 = vcmp.lt.s32.totalorder %v1174, %v1097
        %vm1186 = vcmp.lt.s32.totalorder %v1178, %v1097
        %v1187 = vsel %vm1179, 1, 0
        %v1188 = vsel %vm1180, 1, 0
        %v1189 = vsel %vm1181, 1, 0
        %v1190 = vsel %vm1182, 1, 0
        %v1191 = vsel %vm1183, 1, 0
        %v1192 = vsel %vm1184, 1, 0
        %v1193 = vsel %vm1185, 1, 0
        %v1194 = vsel %vm1186, 1, 0
        %v1195 = vcvt.s32.f32 %v1187
        %v1196 = vcvt.s32.f32 %v1188
        %v1197 = vcvt.s32.f32 %v1189
        %v1198 = vcvt.s32.f32 %v1190
        %v1199 = vcvt.s32.f32 %v1191
        %v1200 = vcvt.s32.f32 %v1192
        %v1201 = vcvt.s32.f32 %v1193
        %v1202 = vcvt.s32.f32 %v1194
        %v1203 = vadd.f32 %v1195, %v1196
        %v1204 = vadd.f32 %v1203, %v1197
        %v1205 = vadd.f32 %v1204, %v1198
        %v1206 = vadd.f32 %v1205, %v1199
        %v1207 = vadd.f32 %v1206, %v1200
        %v1208 = vadd.f32 %v1207, %v1201
        %v1209 = vadd.f32 %v1208, %v1202
        %v1210 = vadd.f32 %v1209, 1.0
        %v1211 = vmul.f32 %v1210, 0.11111111
        %vm1220 = vcmask 1041409
        %v1221 = vsel %vm1220, %v1053, %v1046
        %vm1222 = vcmask 1042434
        %v1223 = vsel %vm1222, %v1060, %v1221
        %vm1224 = vcmask 1043459
        %v1225 = vsel %vm1224, %v1067, %v1223
        %vm1226 = vcmask 1044484
        %v1227 = vsel %vm1226, %v1074, %v1225
        %vm1228 = vcmask 1045509
        %v1229 = vsel %vm1228, %v1081, %v1227
        %vm1230 = vcmask 1046534
        %v1231 = vsel %vm1230, %v1088, %v1229
        %vm1232 = vcmask 1047559
        %v1233 = vsel %vm1232, %v1095, %v1231
        %v1235 = vsub.f32 %v1211, %v1233
        %v1236 = vmul.f32 %v1235, %v1235
        %1237 = vadd.xlane.f32.xlu0 %v1236
        %v1238 = vpop.xlane.xlu0 %1237
        %v1239 = vrot.slane %v1238, 4
        %v1240 = vadd.f32 %v1238, %v1239
        %v1241 = vrot.slane %v1240, 2
        %v1242 = vadd.f32 %v1240, %v1241
        %v1243 = vrot.slane %v1242, 1
        %v1244 = vadd.f32 %v1242, %v1243
        %s1245 = vtos %v1244
        %v1246 = vstv %s1245
        %1247 = vst [vmem:[%s172] sm:$0x1] %v1246
        %s1248 = sand.u32 %s75, 1
        %s1249 = scalar_lea.sflag [#allocation4], %s1248
        %s1250 = sand.u32 %s75, 1
        %s1251 = scalar_lea.vmem [#allocation7], %s1250
        // Predicated region
        $region37: #{tpu_custom_call.1} parent=27 // pred_check
          %p1252 = pneg %p85
        $region38: #{tpu_custom_call.1} parent=27 // pred_check_branch
          %1254 = sbr.rel (%p1252) target = $region40
        $region39: #{tpu_custom_call.1} parent=27 // pred_region
          %s1256 = ssub.s32 16, 16
          %1257 = vsyncadd %s1249, %s1256
          %s1258 = smul.addr %s20, 16
          %s1259 = scalar_lea.hbm %s2, %s1258
          %s1261 = sshll.u32 %s1251, 4
          %s1262 = int_to_ptr.vmem [resolvable:$true] %s1261
          %1264 = dma.vmem_to_hbm [thread:$0]  %s1262, 16, %s1259, %s1249
        $region40: #{tpu_custom_call.1} parent=27 // pred_fallthru
          _
      $region28: #{tpu_custom_call.1} parent=5 // pred_fallthru
        _
      %p1265 = scmp.le.s32.totalorder 2, %s15
      // Predicated region
      $region41: #{tpu_custom_call.1} parent=5 // pred_check
        %p1266 = pneg %p1265
      $region42: #{tpu_custom_call.1} parent=5 // pred_check_branch
        %1268 = sbr.rel (%p1266) target = $region44
      $region43: #{tpu_custom_call.1} parent=5 // pred_region
        %s1269 = ssub.s32 %s15, 2
        // Predicated region
        $region45: #{tpu_custom_call.1} parent=43 // pred_check
          %p1270 = pneg %p91
        $region46: #{tpu_custom_call.1} parent=43 // pred_check_branch
          %1272 = sbr.rel (%p1270) target = $region48
        $region47: #{tpu_custom_call.1} parent=43 // pred_region
          %s1273 = sand.u32 %s76, 1
          %s1274 = scalar_lea.sflag [#allocation4], %s1273
          %s1275 = sand.u32 %s76, 1
          %s1276 = scalar_lea.vmem [#allocation7], %s1275
          %1277 = dma.done %s1274, 16
        $region48: #{tpu_custom_call.1} parent=43 // pred_fallthru
          _
      $region44: #{tpu_custom_call.1} parent=5 // pred_fallthru
        _
    $region6: #{tpu_custom_call.1} parent=1 // loop_footer
      %s19 = sadd.s32 1, %s15
    $region7: #{tpu_custom_call.1} parent=1 // loop_footer_branch
      %14 = sbr.rel target = $region3
    $region8: #{tpu_custom_call.1} parent=1 // loop_exit
      _
    %1278 = vsyncpa [#allocation3], 1
    %s1279 = scalar_lea.sflag [#allocation3], 1
    %1280 = vsyncpa %s1279, 1
    %1281 = vsyncpa [#allocation6], 1
    %1282 = vsyncpa [#allocation4], 1
    %s1283 = scalar_lea.sflag [#allocation4], 1
    %1284 = vsyncpa %s1283, 1

</llo_original>
